<compile_context>
chip_gen: v6e
topology: v6e:2x2x1
jax: 0.10.0
libtpu: 0.0.40
codegen_flags: <defaults>
</compile_context>

<pallas_src>
import math

import jax
import jax.numpy as jnp
from jax.experimental import pallas as pl
from jax.experimental.pallas import tpu as pltpu


_VMEM_LIMIT = 48 * 1024 * 1024    # > v5e's 16 MiB scoped default, < v7x's 64 MiB physical
_VMEM_BUDGET = 36 * 1024 * 1024   # tile-sizing target (leaves compiler-scratch headroom)


def _round_up(x, m):
    return (x + m - 1) // m * m


def _infer_kernel(x_ref, wyg_ref, byg_ref, wa2_ref, ba2_ref, out_ref):
    Hp = wa2_ref.shape[1]

    x = x_ref[...].astype(jnp.bfloat16)               # f32 tile from HBM -> bf16 on-chip

    # --- fused GatedTrans matmul: one MXU pass for both gates, f32 accumulate ---
    yg = jnp.dot(x, wyg_ref[...], preferred_element_type=jnp.float32) + byg_ref[...]

    y = jnp.tanh(yg[:, :Hp])                          # tanh branch (EUP)
    g_pre = yg[:, Hp:]
    g = jnp.where(g_pre >= 0.0, g_pre, 0.01 * g_pre)  # LeakyReLU(0.01)
    e = y * g                                         # (TM, Hp) f32, un-normalized

    # --- attention Linear (H -> 2) on un-normalized e, transposed/lane-dense ---
    logits_un = jax.lax.dot_general(
        wa2_ref[...], e.astype(jnp.bfloat16),
        dimension_numbers=(((1,), (1,)), ((), ())),   # contract hidden axis (A @ B^T)
        preferred_element_type=jnp.float32)           # (2, TM)

    # --- deferred F.normalize(p=2, dim=-1): (e/||e||) @ Wa^T == (e @ Wa^T)/||e|| ---
    # Row sum-of-squares is produced lane-dense via a tiny ones-vector MXU
    # contraction so the scale broadcasts directly over the (2, TM) logits.
    sq = e * e
    sumsq_t = jax.lax.dot_general(
        jnp.ones((1, Hp), jnp.float32), sq,
        dimension_numbers=(((1,), (1,)), ((), ())),
        preferred_element_type=jnp.float32)           # (1, TM)
    inv_norm = jax.lax.rsqrt(jnp.maximum(sumsq_t, 1e-24))   # == 1 / max(||e||, 1e-12)

    logits_t = logits_un * inv_norm + ba2_ref[...]    # (2, TM)
    l0 = logits_t[0:1, :]
    l1 = logits_t[1:2, :]

    # --- eval path: one-hot argmax over the 2 rows (ties -> index 0, like torch.max) ---
    take1 = l1 > l0
    out_ref[0:1, :] = jnp.where(take1, 0.0, 1.0)
    out_ref[1:2, :] = jnp.where(take1, 1.0, 0.0)

    # --- Lambda = softmax over the 2 rows (exact reciprocal; rows sum to 1 in f32) ---
    mx = jnp.maximum(l0, l1)
    e0 = jnp.exp(l0 - mx)
    e1 = jnp.exp(l1 - mx)
    inv = pl.reciprocal(e0 + e1, approx=False)
    out_ref[2:3, :] = e0 * inv
    out_ref[3:4, :] = e1 * inv


def _vmem_estimate(tm, d, hp, weight_bufs=2):
    x_tiles = 2 * tm * d * 4                           # double-buffered f32 x tiles
    x_cast = tm * d * 2                                # in-kernel bf16 copy of x
    weights = weight_bufs * (d * 2 * hp * 2 + 2 * hp * 4 + 2 * hp * 2 + 8)
    f32_tail = 6 * tm * hp * 4                         # yg + y/g/e/sq f32 temporaries
    out_tiles = 2 * 4 * tm * 4
    return x_tiles + x_cast + weights + f32_tail + out_tiles


def _pick_tm(m, d, hp):
    """Row-tile size: big tiles amortize the ~0.35us/step overhead, aim for >=4
    grid steps, cap at 1024, shrink until the f32 tail fits the VMEM budget
    (v7x only has 64 MiB). Prefer a tile that divides M (skips the row-pad pass
    over x) when it costs at most a 2x tile-size reduction."""
    target = max(128, _round_up(pl.cdiv(m, 4), 128))
    fitting = [c for c in (1024, 512, 256, 128)
               if c <= target and _vmem_estimate(c, d, hp) <= _VMEM_BUDGET]
    if not fitting:
        return 128
    best = fitting[0]
    for c in fitting:
        if c * 2 >= best and m % c == 0:
            return c
    return best


def infer_module_forward(ques, params):
    """ques: (batch, num_rounds, word_embedding_size) float32.
    Returns (ques_gs, Lambda), both (batch, num_rounds, 2) float32."""
    B, R, D = ques.shape
    M = B * R
    H = params["wy"].shape[1]
    Hp = _round_up(H, 128)

    TM = _pick_tm(M, D, Hp)
    Mp = _round_up(M, TM)

    # --- weight prep (tiny): zero-pad hidden dim, fuse gate matmuls, pre-transpose wa ---
    pad_h = ((0, 0), (0, Hp - H))
    wyg = jnp.concatenate(
        [jnp.pad(params["wy"], pad_h), jnp.pad(params["wg"], pad_h)],
        axis=1).astype(jnp.bfloat16)                                    # (D, 2*Hp)
    byg = jnp.concatenate(
        [jnp.pad(params["by"], pad_h), jnp.pad(params["bg"], pad_h)],
        axis=1).astype(jnp.float32)                                     # (1, 2*Hp)
    wa2 = jnp.pad(params["wa"], ((0, Hp - H), (0, 0))).T.astype(jnp.bfloat16)  # (2, Hp)
    ba2 = params["ba"].reshape(2, 1).astype(jnp.float32)                # (2, 1)

    # x stays float32 (no dtype-convert pass); rows padded only if M % TM != 0.
    x = ques.reshape(M, D).astype(jnp.float32)
    if Mp != M:
        x = jnp.pad(x, ((0, Mp - M), (0, 0)))

    def build(single_buffer_weights):
        w_kwargs = ({"pipeline_mode": pl.Buffered(1)}
                    if single_buffer_weights else {})
        return pl.pallas_call(
            _infer_kernel,
            grid_spec=pltpu.PrefetchScalarGridSpec(
                num_scalar_prefetch=0,
                grid=(Mp // TM,),
                in_specs=[
                    pl.BlockSpec((TM, D), lambda i: (i, 0)),              # x: streamed tiles
                    pl.BlockSpec((D, 2 * Hp), lambda i: (0, 0), **w_kwargs),   # fused weights
                    pl.BlockSpec((1, 2 * Hp), lambda i: (0, 0), **w_kwargs),   # fused bias
                    pl.BlockSpec((2, Hp), lambda i: (0, 0), **w_kwargs),       # wa^T
                    pl.BlockSpec((2, 1), lambda i: (0, 0), **w_kwargs),        # ba
                ],
                out_specs=pl.BlockSpec((4, TM), lambda i: (0, i)),        # [gs0,gs1,lam0,lam1]
            ),
            out_shape=jax.ShapeDtypeStruct((4, Mp), jnp.float32),
            compiler_params=pltpu.CompilerParams(
                dimension_semantics=("parallel",),      # dual-TC sharding on v7x
                vmem_limit_bytes=_VMEM_LIMIT),
        )

    try:
        out = build(True)(x, wyg, byg, wa2, ba2)
    except Exception:
        # Fallback if this JAX build doesn't accept single-buffered BlockSpecs.
        out = build(False)(x, wyg, byg, wa2, ba2)

    gs = out[0:2, :M].T.reshape(B, R, 2)
    lam = out[2:4, :M].T.reshape(B, R, 2)
    return gs, lam


def _reference_forward(ques, params):
    """Pure-JAX f32 reference of the eval-mode forward (validation only)."""
    y = jnp.tanh(ques @ params["wy"] + params["by"])
    g_pre = ques @ params["wg"] + params["bg"]
    g = jnp.where(g_pre >= 0.0, g_pre, 0.01 * g_pre)
    e = y * g
    norm = jnp.sqrt(jnp.sum(e * e, axis=-1, keepdims=True))
    e = e / jnp.maximum(norm, 1e-12)
    logits = e @ params["wa"] + params["ba"]
    take1 = logits[..., 1:2] > logits[..., 0:1]
    gs = jnp.concatenate([jnp.where(take1, 0.0, 1.0),
                          jnp.where(take1, 1.0, 0.0)], axis=-1)
    lam = jax.nn.softmax(logits, axis=-1)
    return gs, lam


def _kaiming_uniform(key, fan_in, fan_out):
    # torch.nn.init.kaiming_uniform_ default (a=0): bound = sqrt(6 / fan_in)
    bound = math.sqrt(6.0 / fan_in)
    # stored pre-transposed: (in_dim, out_dim)
    return jax.random.uniform(key, (fan_in, fan_out), jnp.float32, -bound, bound)


def make_params(key, word_embedding_size, lstm_hidden_size):
    k1, k2, k3 = jax.random.split(key, 3)
    return {
        "wy": _kaiming_uniform(k1, word_embedding_size, lstm_hidden_size),
        "by": jnp.zeros((1, lstm_hidden_size), jnp.float32),
        "wg": _kaiming_uniform(k2, word_embedding_size, lstm_hidden_size),
        "bg": jnp.zeros((1, lstm_hidden_size), jnp.float32),
        "wa": _kaiming_uniform(k3, lstm_hidden_size, 2),
        "ba": jnp.zeros((1, 2), jnp.float32),
    }


if __name__ == "__main__":
    batch, num_rounds = 2, 8
    word_embedding_size, lstm_hidden_size = 32, 32

    key = jax.random.PRNGKey(0)
    k_x, k_p = jax.random.split(key)
    ques = jax.random.normal(k_x, (batch, num_rounds, word_embedding_size),
                             jnp.float32)
    params = make_params(k_p, word_embedding_size, lstm_hidden_size)

    ques_gs, Lambda = infer_module_forward(ques, params)
    jax.block_until_ready((ques_gs, Lambda))

    ref_gs, ref_lam = _reference_forward(ques, params)

    assert ques_gs.shape == (batch, num_rounds, 2)
    assert Lambda.shape == (batch, num_rounds, 2)
    # one-hot rows sum to exactly 1; softmax rows sum to 1 within f32 rounding
    assert bool(jnp.all(jnp.sum(ques_gs, axis=-1) == 1.0))
    assert bool(jnp.allclose(jnp.sum(Lambda, axis=-1), 1.0, atol=1e-3))
    # matches the f32 reference up to bf16 matmul error
    assert bool(jnp.allclose(Lambda, ref_lam, atol=3e-2, rtol=3e-2))
    # hard argmax matches wherever the reference is not a near-tie
    confident = jnp.abs(ref_lam[..., :1] - 0.5) > 0.05
    assert bool(jnp.all(jnp.where(confident, ques_gs == ref_gs, True)))
    print("KERNEL_OK")
</pallas_src>

<mosaic_0001>
module attributes {stable_mosaic.version = 11 : i64} {
  func.func @_infer_kernel(%arg0: i32, %arg1: memref<128x32xf32, #tpu.memory_space<vmem>>, %arg2: memref<32x256xbf16, #tpu.memory_space<vmem>>, %arg3: memref<1x256xf32, #tpu.memory_space<vmem>>, %arg4: memref<2x128xbf16, #tpu.memory_space<vmem>>, %arg5: memref<2x1xf32, #tpu.memory_space<vmem>>, %arg6: memref<4x128xf32, #tpu.memory_space<vmem>>) attributes {dimension_semantics = [#tpu.dimension_semantics<parallel>], iteration_bounds = array<i64: 1>, scalar_prefetch = 0 : i64, scratch_operands = 0 : i64, tpu.core_type = #tpu.core_type<tc>, window_params = [{transform_indices = @transform_0, window_bounds = array<i64: 128, 32>}, {pipeline_mode = #tpu.pipeline_mode<synchronous>, transform_indices = @transform_1, window_bounds = array<i64: 32, 256>}, {pipeline_mode = #tpu.pipeline_mode<synchronous>, transform_indices = @transform_2, window_bounds = array<i64: 1, 256>}, {pipeline_mode = #tpu.pipeline_mode<synchronous>, transform_indices = @transform_3, window_bounds = array<i64: 2, 128>}, {pipeline_mode = #tpu.pipeline_mode<synchronous>, transform_indices = @transform_4, window_bounds = array<i64: 2, 1>}, {transform_indices = @transform_5, window_bounds = array<i64: 4, 128>}]} {
    %c0 = arith.constant 0 : index
    %c0_0 = arith.constant 0 : index
    %0 = vector.load %arg1[%c0, %c0_0] : memref<128x32xf32, #tpu.memory_space<vmem>>, vector<128x32xf32>
    %1 = arith.truncf %0 : vector<128x32xf32> to vector<128x32xbf16>
    %c0_1 = arith.constant 0 : index
    %c0_2 = arith.constant 0 : index
    %2 = vector.load %arg2[%c0_1, %c0_2] : memref<32x256xbf16, #tpu.memory_space<vmem>>, vector<32x256xbf16>
    %cst = arith.constant dense<0.000000e+00> : vector<128x256xf32>
    %3 = tpu.matmul %1, %2, %cst {dimension_numbers = #tpu.dot_dimension_numbers<[1], [0], [0], [1], [0, 0, 1, 1], [], []>} : vector<128x32xbf16>, vector<32x256xbf16>, vector<128x256xf32> -> vector<128x256xf32>
    %c0_3 = arith.constant 0 : index
    %c0_4 = arith.constant 0 : index
    %4 = vector.load %arg3[%c0_3, %c0_4] : memref<1x256xf32, #tpu.memory_space<vmem>>, vector<1x256xf32>
    %5 = vector.broadcast %4 : vector<1x256xf32> to vector<128x256xf32>
    %6 = arith.addf %3, %5 : vector<128x256xf32>
    %7 = vector.extract_strided_slice %6 {offsets = [0, 0], sizes = [128, 128], strides = [1, 1]} : vector<128x256xf32> to vector<128x128xf32>
    %8 = math.tanh %7 : vector<128x128xf32>
    %9 = vector.extract_strided_slice %6 {offsets = [0, 128], sizes = [128, 128], strides = [1, 1]} : vector<128x256xf32> to vector<128x128xf32>
    %cst_5 = arith.constant 0.000000e+00 : f32
    %10 = vector.broadcast %cst_5 : f32 to vector<128x128xf32>
    %11 = arith.cmpf oge, %9, %10 : vector<128x128xf32>
    %cst_6 = arith.constant 0.00999999977 : f32
    %12 = vector.broadcast %cst_6 : f32 to vector<128x128xf32>
    %13 = arith.mulf %12, %9 : vector<128x128xf32>
    %14 = arith.select %11, %9, %13 : vector<128x128xi1>, vector<128x128xf32>
    %15 = arith.mulf %8, %14 : vector<128x128xf32>
    %c0_7 = arith.constant 0 : index
    %c0_8 = arith.constant 0 : index
    %16 = vector.load %arg4[%c0_7, %c0_8] : memref<2x128xbf16, #tpu.memory_space<vmem>>, vector<2x128xbf16>
    %17 = arith.truncf %15 : vector<128x128xf32> to vector<128x128xbf16>
    %cst_9 = arith.constant dense<0.000000e+00> : vector<2x128xf32>
    %18 = tpu.matmul %16, %17, %cst_9 {dimension_numbers = #tpu.dot_dimension_numbers<[1], [1], [0], [0], [0, 0, 1, 0], [], []>} : vector<2x128xbf16>, vector<128x128xbf16>, vector<2x128xf32> -> vector<2x128xf32>
    %19 = arith.mulf %15, %15 : vector<128x128xf32>
    %cst_10 = arith.constant 1.000000e+00 : f32
    %20 = vector.broadcast %cst_10 : f32 to vector<1x128xf32>
    %cst_11 = arith.constant dense<0.000000e+00> : vector<1x128xf32>
    %21 = tpu.matmul %20, %19, %cst_11 {dimension_numbers = #tpu.dot_dimension_numbers<[1], [1], [0], [0], [0, 0, 1, 0], [], []>} : vector<1x128xf32>, vector<128x128xf32>, vector<1x128xf32> -> vector<1x128xf32>
    %cst_12 = arith.constant 1.000000e-24 : f32
    %22 = vector.broadcast %cst_12 : f32 to vector<1x128xf32>
    %23 = arith.maximumf %21, %22 : vector<1x128xf32>
    %24 = math.rsqrt %23 : vector<1x128xf32>
    %25 = vector.broadcast %24 : vector<1x128xf32> to vector<2x128xf32>
    %26 = arith.mulf %18, %25 : vector<2x128xf32>
    %c0_13 = arith.constant 0 : index
    %c0_14 = arith.constant 0 : index
    %27 = vector.load %arg5[%c0_13, %c0_14] : memref<2x1xf32, #tpu.memory_space<vmem>>, vector<2x1xf32>
    %28 = vector.broadcast %27 : vector<2x1xf32> to vector<2x128xf32>
    %29 = arith.addf %26, %28 : vector<2x128xf32>
    %30 = vector.extract_strided_slice %29 {offsets = [0, 0], sizes = [1, 128], strides = [1, 1]} : vector<2x128xf32> to vector<1x128xf32>
    %31 = vector.extract_strided_slice %29 {offsets = [1, 0], sizes = [1, 128], strides = [1, 1]} : vector<2x128xf32> to vector<1x128xf32>
    %32 = arith.cmpf ogt, %31, %30 : vector<1x128xf32>
    %cst_15 = arith.constant 0.000000e+00 : f32
    %cst_16 = arith.constant 1.000000e+00 : f32
    %33 = vector.broadcast %cst_15 : f32 to vector<1x128xf32>
    %34 = vector.broadcast %cst_16 : f32 to vector<1x128xf32>
    %35 = arith.select %32, %33, %34 : vector<1x128xi1>, vector<1x128xf32>
    %c0_17 = arith.constant 0 : index
    %c0_18 = arith.constant 0 : index
    %36 = vector.load %arg6[%c0_17, %c0_18] : memref<4x128xf32, #tpu.memory_space<vmem>>, vector<1x128xf32>
    tpu.vector_store %arg6[%c0_17, %c0_18], %35 {strides = array<i32>} : memref<4x128xf32, #tpu.memory_space<vmem>>, vector<1x128xf32>,
    %cst_19 = arith.constant 1.000000e+00 : f32
    %cst_20 = arith.constant 0.000000e+00 : f32
    %37 = vector.broadcast %cst_19 : f32 to vector<1x128xf32>
    %38 = vector.broadcast %cst_20 : f32 to vector<1x128xf32>
    %39 = arith.select %32, %37, %38 : vector<1x128xi1>, vector<1x128xf32>
    %c1 = arith.constant 1 : index
    %c0_21 = arith.constant 0 : index
    %40 = vector.load %arg6[%c1, %c0_21] : memref<4x128xf32, #tpu.memory_space<vmem>>, vector<1x128xf32>
    tpu.vector_store %arg6[%c1, %c0_21], %39 {strides = array<i32>} : memref<4x128xf32, #tpu.memory_space<vmem>>, vector<1x128xf32>,
    %41 = arith.maximumf %30, %31 : vector<1x128xf32>
    %42 = arith.subf %30, %41 : vector<1x128xf32>
    %43 = math.exp %42 : vector<1x128xf32>
    %44 = arith.subf %31, %41 : vector<1x128xf32>
    %45 = math.exp %44 : vector<1x128xf32>
    %46 = arith.addf %43, %45 : vector<1x128xf32>
    %47 = tpu.reciprocal %46 : vector<1x128xf32> -> vector<1x128xf32>
    %48 = arith.mulf %43, %47 : vector<1x128xf32>
    %c2 = arith.constant 2 : index
    %c0_22 = arith.constant 0 : index
    %49 = vector.load %arg6[%c2, %c0_22] : memref<4x128xf32, #tpu.memory_space<vmem>>, vector<1x128xf32>
    tpu.vector_store %arg6[%c2, %c0_22], %48 {strides = array<i32>} : memref<4x128xf32, #tpu.memory_space<vmem>>, vector<1x128xf32>,
    %50 = arith.mulf %45, %47 : vector<1x128xf32>
    %c3 = arith.constant 3 : index
    %c0_23 = arith.constant 0 : index
    %51 = vector.load %arg6[%c3, %c0_23] : memref<4x128xf32, #tpu.memory_space<vmem>>, vector<1x128xf32>
    tpu.vector_store %arg6[%c3, %c0_23], %50 {strides = array<i32>} : memref<4x128xf32, #tpu.memory_space<vmem>>, vector<1x128xf32>,
    return
  }
  func.func @transform_0(%arg0: i32) -> (i32, i32) {
    %c0_i32 = arith.constant 0 : i32
    %c0_i32_0 = arith.constant 0 : i32
    return %arg0, %c0_i32 : i32, i32
  }
  func.func @transform_1(%arg0: i32) -> (i32, i32) {
    %c0_i32 = arith.constant 0 : i32
    %c0_i32_0 = arith.constant 0 : i32
    %c0_i32_1 = arith.constant 0 : i32
    return %c0_i32, %c0_i32_0 : i32, i32
  }
  func.func @transform_2(%arg0: i32) -> (i32, i32) {
    %c0_i32 = arith.constant 0 : i32
    %c0_i32_0 = arith.constant 0 : i32
    %c0_i32_1 = arith.constant 0 : i32
    return %c0_i32, %c0_i32_0 : i32, i32
  }
  func.func @transform_3(%arg0: i32) -> (i32, i32) {
    %c0_i32 = arith.constant 0 : i32
    %c0_i32_0 = arith.constant 0 : i32
    %c0_i32_1 = arith.constant 0 : i32
    return %c0_i32, %c0_i32_0 : i32, i32
  }
  func.func @transform_4(%arg0: i32) -> (i32, i32) {
    %c0_i32 = arith.constant 0 : i32
    %c0_i32_0 = arith.constant 0 : i32
    %c0_i32_1 = arith.constant 0 : i32
    return %c0_i32, %c0_i32_0 : i32, i32
  }
  func.func @transform_5(%arg0: i32) -> (i32, i32) {
    %c0_i32 = arith.constant 0 : i32
    %c0_i32_0 = arith.constant 0 : i32
    return %c0_i32, %arg0 : i32, i32
  }
}

module attributes {stable_mosaic.version = 11 : i64} {
  func.func @_infer_kernel(%arg0: i32, %arg1: memref<128x32xf32, #tpu.memory_space<vmem>>, %arg2: memref<32x256xbf16, #tpu.memory_space<vmem>>, %arg3: memref<1x256xf32, #tpu.memory_space<vmem>>, %arg4: memref<2x128xbf16, #tpu.memory_space<vmem>>, %arg5: memref<2x1xf32, #tpu.memory_space<vmem>>, %arg6: memref<4x128xf32, #tpu.memory_space<vmem>>) attributes {dimension_semantics = [#tpu.dimension_semantics<parallel>], iteration_bounds = array<i64: 1>, scalar_prefetch = 0 : i64, scratch_operands = 0 : i64, tpu.core_type = #tpu.core_type<tc>, window_params = [{transform_indices = @transform_0, window_bounds = array<i64: 128, 32>}, {pipeline_mode = #tpu.pipeline_mode<synchronous>, transform_indices = @transform_1, window_bounds = array<i64: 32, 256>}, {pipeline_mode = #tpu.pipeline_mode<synchronous>, transform_indices = @transform_2, window_bounds = array<i64: 1, 256>}, {pipeline_mode = #tpu.pipeline_mode<synchronous>, transform_indices = @transform_3, window_bounds = array<i64: 2, 128>}, {pipeline_mode = #tpu.pipeline_mode<synchronous>, transform_indices = @transform_4, window_bounds = array<i64: 2, 1>}, {transform_indices = @transform_5, window_bounds = array<i64: 4, 128>}]} {
    %c0 = arith.constant 0 : index
    %c0_0 = arith.constant 0 : index
    %0 = vector.load %arg1[%c0, %c0_0] : memref<128x32xf32, #tpu.memory_space<vmem>>, vector<128x32xf32>
    %1 = arith.truncf %0 : vector<128x32xf32> to vector<128x32xbf16>
    %c0_1 = arith.constant 0 : index
    %c0_2 = arith.constant 0 : index
    %2 = vector.load %arg2[%c0_1, %c0_2] : memref<32x256xbf16, #tpu.memory_space<vmem>>, vector<32x256xbf16>
    %cst = arith.constant dense<0.000000e+00> : vector<128x256xf32>
    %3 = tpu.matmul %1, %2, %cst {dimension_numbers = #tpu.dot_dimension_numbers<[1], [0], [0], [1], [0, 0, 1, 1], [], []>} : vector<128x32xbf16>, vector<32x256xbf16>, vector<128x256xf32> -> vector<128x256xf32>
    %c0_3 = arith.constant 0 : index
    %c0_4 = arith.constant 0 : index
    %4 = vector.load %arg3[%c0_3, %c0_4] : memref<1x256xf32, #tpu.memory_space<vmem>>, vector<1x256xf32>
    %5 = vector.broadcast %4 : vector<1x256xf32> to vector<128x256xf32>
    %6 = arith.addf %3, %5 : vector<128x256xf32>
    %7 = vector.extract_strided_slice %6 {offsets = [0, 0], sizes = [128, 128], strides = [1, 1]} : vector<128x256xf32> to vector<128x128xf32>
    %8 = math.tanh %7 : vector<128x128xf32>
    %9 = vector.extract_strided_slice %6 {offsets = [0, 128], sizes = [128, 128], strides = [1, 1]} : vector<128x256xf32> to vector<128x128xf32>
    %cst_5 = arith.constant 0.000000e+00 : f32
    %10 = vector.broadcast %cst_5 : f32 to vector<128x128xf32>
    %11 = arith.cmpf oge, %9, %10 : vector<128x128xf32>
    %cst_6 = arith.constant 0.00999999977 : f32
    %12 = vector.broadcast %cst_6 : f32 to vector<128x128xf32>
    %13 = arith.mulf %12, %9 : vector<128x128xf32>
    %14 = arith.select %11, %9, %13 : vector<128x128xi1>, vector<128x128xf32>
    %15 = arith.mulf %8, %14 : vector<128x128xf32>
    %c0_7 = arith.constant 0 : index
    %c0_8 = arith.constant 0 : index
    %16 = vector.load %arg4[%c0_7, %c0_8] : memref<2x128xbf16, #tpu.memory_space<vmem>>, vector<2x128xbf16>
    %17 = arith.truncf %15 : vector<128x128xf32> to vector<128x128xbf16>
    %cst_9 = arith.constant dense<0.000000e+00> : vector<2x128xf32>
    %18 = tpu.matmul %16, %17, %cst_9 {dimension_numbers = #tpu.dot_dimension_numbers<[1], [1], [0], [0], [0, 0, 1, 0], [], []>} : vector<2x128xbf16>, vector<128x128xbf16>, vector<2x128xf32> -> vector<2x128xf32>
    %19 = arith.mulf %15, %15 : vector<128x128xf32>
    %cst_10 = arith.constant 1.000000e+00 : f32
    %20 = vector.broadcast %cst_10 : f32 to vector<1x128xf32>
    %cst_11 = arith.constant dense<0.000000e+00> : vector<1x128xf32>
    %21 = tpu.matmul %20, %19, %cst_11 {dimension_numbers = #tpu.dot_dimension_numbers<[1], [1], [0], [0], [0, 0, 1, 0], [], []>} : vector<1x128xf32>, vector<128x128xf32>, vector<1x128xf32> -> vector<1x128xf32>
    %cst_12 = arith.constant 1.000000e-24 : f32
    %22 = vector.broadcast %cst_12 : f32 to vector<1x128xf32>
    %23 = arith.maximumf %21, %22 : vector<1x128xf32>
    %24 = math.rsqrt %23 : vector<1x128xf32>
    %25 = vector.broadcast %24 : vector<1x128xf32> to vector<2x128xf32>
    %26 = arith.mulf %18, %25 : vector<2x128xf32>
    %c0_13 = arith.constant 0 : index
    %c0_14 = arith.constant 0 : index
    %27 = vector.load %arg5[%c0_13, %c0_14] : memref<2x1xf32, #tpu.memory_space<vmem>>, vector<2x1xf32>
    %28 = vector.broadcast %27 : vector<2x1xf32> to vector<2x128xf32>
    %29 = arith.addf %26, %28 : vector<2x128xf32>
    %30 = vector.extract_strided_slice %29 {offsets = [0, 0], sizes = [1, 128], strides = [1, 1]} : vector<2x128xf32> to vector<1x128xf32>
    %31 = vector.extract_strided_slice %29 {offsets = [1, 0], sizes = [1, 128], strides = [1, 1]} : vector<2x128xf32> to vector<1x128xf32>
    %32 = arith.cmpf ogt, %31, %30 : vector<1x128xf32>
    %cst_15 = arith.constant 0.000000e+00 : f32
    %cst_16 = arith.constant 1.000000e+00 : f32
    %33 = vector.broadcast %cst_15 : f32 to vector<1x128xf32>
    %34 = vector.broadcast %cst_16 : f32 to vector<1x128xf32>
    %35 = arith.select %32, %33, %34 : vector<1x128xi1>, vector<1x128xf32>
    %c0_17 = arith.constant 0 : index
    %c0_18 = arith.constant 0 : index
    %36 = vector.load %arg6[%c0_17, %c0_18] : memref<4x128xf32, #tpu.memory_space<vmem>>, vector<1x128xf32>
    tpu.vector_store %arg6[%c0_17, %c0_18], %35 {strides = array<i32>} : memref<4x128xf32, #tpu.memory_space<vmem>>, vector<1x128xf32>,
    %cst_19 = arith.constant 1.000000e+00 : f32
    %cst_20 = arith.constant 0.000000e+00 : f32
    %37 = vector.broadcast %cst_19 : f32 to vector<1x128xf32>
    %38 = vector.broadcast %cst_20 : f32 to vector<1x128xf32>
    %39 = arith.select %32, %37, %38 : vector<1x128xi1>, vector<1x128xf32>
    %c1 = arith.constant 1 : index
    %c0_21 = arith.constant 0 : index
    %40 = vector.load %arg6[%c1, %c0_21] : memref<4x128xf32, #tpu.memory_space<vmem>>, vector<1x128xf32>
    tpu.vector_store %arg6[%c1, %c0_21], %39 {strides = array<i32>} : memref<4x128xf32, #tpu.memory_space<vmem>>, vector<1x128xf32>,
    %41 = arith.maximumf %30, %31 : vector<1x128xf32>
    %42 = arith.subf %30, %41 : vector<1x128xf32>
    %43 = math.exp %42 : vector<1x128xf32>
    %44 = arith.subf %31, %41 : vector<1x128xf32>
    %45 = math.exp %44 : vector<1x128xf32>
    %46 = arith.addf %43, %45 : vector<1x128xf32>
    %47 = tpu.reciprocal %46 : vector<1x128xf32> -> vector<1x128xf32>
    %48 = arith.mulf %43, %47 : vector<1x128xf32>
    %c2 = arith.constant 2 : index
    %c0_22 = arith.constant 0 : index
    %49 = vector.load %arg6[%c2, %c0_22] : memref<4x128xf32, #tpu.memory_space<vmem>>, vector<1x128xf32>
    tpu.vector_store %arg6[%c2, %c0_22], %48 {strides = array<i32>} : memref<4x128xf32, #tpu.memory_space<vmem>>, vector<1x128xf32>,
    %50 = arith.mulf %45, %47 : vector<1x128xf32>
    %c3 = arith.constant 3 : index
    %c0_23 = arith.constant 0 : index
    %51 = vector.load %arg6[%c3, %c0_23] : memref<4x128xf32, #tpu.memory_space<vmem>>, vector<1x128xf32>
    tpu.vector_store %arg6[%c3, %c0_23], %50 {strides = array<i32>} : memref<4x128xf32, #tpu.memory_space<vmem>>, vector<1x128xf32>,
    return
  }
  func.func @transform_0(%arg0: i32) -> (i32, i32) {
    %c0_i32 = arith.constant 0 : i32
    %c0_i32_0 = arith.constant 0 : i32
    return %arg0, %c0_i32 : i32, i32
  }
  func.func @transform_1(%arg0: i32) -> (i32, i32) {
    %c0_i32 = arith.constant 0 : i32
    %c0_i32_0 = arith.constant 0 : i32
    %c0_i32_1 = arith.constant 0 : i32
    return %c0_i32, %c0_i32_0 : i32, i32
  }
  func.func @transform_2(%arg0: i32) -> (i32, i32) {
    %c0_i32 = arith.constant 0 : i32
    %c0_i32_0 = arith.constant 0 : i32
    %c0_i32_1 = arith.constant 0 : i32
    return %c0_i32, %c0_i32_0 : i32, i32
  }
  func.func @transform_3(%arg0: i32) -> (i32, i32) {
    %c0_i32 = arith.constant 0 : i32
    %c0_i32_0 = arith.constant 0 : i32
    %c0_i32_1 = arith.constant 0 : i32
    return %c0_i32, %c0_i32_0 : i32, i32
  }
  func.func @transform_4(%arg0: i32) -> (i32, i32) {
    %c0_i32 = arith.constant 0 : i32
    %c0_i32_0 = arith.constant 0 : i32
    %c0_i32_1 = arith.constant 0 : i32
    return %c0_i32, %c0_i32_0 : i32, i32
  }
  func.func @transform_5(%arg0: i32) -> (i32, i32) {
    %c0_i32 = arith.constant 0 : i32
    %c0_i32_0 = arith.constant 0 : i32
    return %c0_i32, %arg0 : i32, i32
  }
}

</mosaic_0001>

<llo_original>
// kernel: tpu_custom_call.1
$region0: #{tpu_custom_call.1}
  #allocation0 [shape = 'u32[]', space=smem, size = 0x4, offset = 0x4, fixed_abs, tag = 'smem constant byte address 0x4 - core index']
  #allocation1 [shape = 'u32[144,128]{1,0:T(1,128)}', space=vmem, size = 0x12000, scoped, tag = 'internal scratch']
  %s0 = inlined_call_operand.vmem [shape: f32[128,32], index: 0, kind: input, shape index: {}]
  %s1 = inlined_call_operand.vmem [shape: bf16[32,256], index: 1, kind: input, shape index: {}]
  %s2 = inlined_call_operand.vmem [shape: f32[1,256], index: 2, kind: input, shape index: {}]
  %s3 = inlined_call_operand.vmem [shape: bf16[2,128], index: 3, kind: input, shape index: {}]
  %s4 = inlined_call_operand.vmem [shape: f32[2,1], index: 4, kind: input, shape index: {}]
  %s5 = inlined_call_operand.hbm [shape: f32[4,128], index: 5, kind: output, shape index: {}]
  %s6 = sld [smem:[#allocation0]]
  $region30: #{tpu_custom_call.1} parent=0
    _
  %s8 = ssub.s32 1, %s6
  %s9 = scalar_select 0, %s8, %s6
  $region1: #{tpu_custom_call.1} parent=0
    #allocation2 [shape = 'u8[2048]{0}', space=vmem, size = 0x800, scoped, tag = 'output window, operand 0, single buffered']
    #allocation3 [shape = 's32[1]{0}', space=sflag, size = 0x4, scoped, tag = 'scoped memory for tpu_custom_call.1']
    %10 = vsyncpa [#allocation3], 0
    // Predicated region
    $region2: #{tpu_custom_call.1} parent=1 // pred_check
      _
    $region3: #{tpu_custom_call.1} parent=1 // pred_check_branch
      %12 = sbr.rel (0) target = $region5
    $region4: #{tpu_custom_call.1} parent=1 // pred_region
      _
    $region5: #{tpu_custom_call.1} parent=1 // pred_fallthru
      _
    // Predicated region
    $region6: #{tpu_custom_call.1} parent=1 // pred_check
      _
    $region7: #{tpu_custom_call.1} parent=1 // pred_check_branch
      %14 = sbr.rel (0) target = $region9
    $region8: #{tpu_custom_call.1} parent=1 // pred_region
      _
    $region9: #{tpu_custom_call.1} parent=1 // pred_fallthru
      _
    // Predicated region
    $region10: #{tpu_custom_call.1} parent=1 // pred_check
      _
    $region11: #{tpu_custom_call.1} parent=1 // pred_check_branch
      %16 = sbr.rel (0) target = $region13
    $region12: #{tpu_custom_call.1} parent=1 // pred_region
      _
    $region13: #{tpu_custom_call.1} parent=1 // pred_fallthru
      _
    // Predicated region
    $region14: #{tpu_custom_call.1} parent=1 // pred_check
      _
    $region15: #{tpu_custom_call.1} parent=1 // pred_check_branch
      %18 = sbr.rel (0) target = $region17
    $region16: #{tpu_custom_call.1} parent=1 // pred_region
      _
    $region17: #{tpu_custom_call.1} parent=1 // pred_fallthru
      _
    // Predicated region
    $region18: #{tpu_custom_call.1} parent=1 // pred_check
      _
    $region19: #{tpu_custom_call.1} parent=1 // pred_check_branch
      %20 = sbr.rel (0) target = $region21
    $region20: #{tpu_custom_call.1} parent=1 // pred_region
      _
    $region21: #{tpu_custom_call.1} parent=1 // pred_fallthru
      _
    %v22 = vld [vmem:[%s0] sm:$0xff]
    %v23 = vld [vmem:[%s0 + $0x8] sm:$0xff]
    %v24 = vld [vmem:[%s0 + $0x10] sm:$0xff]
    %v25 = vld [vmem:[%s0 + $0x18] sm:$0xff]
    %v26 = vld [vmem:[%s0 + $0x20] sm:$0xff]
    %v27 = vld [vmem:[%s0 + $0x28] sm:$0xff]
    %v28 = vld [vmem:[%s0 + $0x30] sm:$0xff]
    %v29 = vld [vmem:[%s0 + $0x38] sm:$0xff]
    %v30 = vld [vmem:[%s0 + $0x40] sm:$0xff]
    %v31 = vld [vmem:[%s0 + $0x48] sm:$0xff]
    %v32 = vld [vmem:[%s0 + $0x50] sm:$0xff]
    %v33 = vld [vmem:[%s0 + $0x58] sm:$0xff]
    %v34 = vld [vmem:[%s0 + $0x60] sm:$0xff]
    %v35 = vld [vmem:[%s0 + $0x68] sm:$0xff]
    %v36 = vld [vmem:[%s0 + $0x70] sm:$0xff]
    %v37 = vld [vmem:[%s0 + $0x78] sm:$0xff]
    %v38 = vpack.c.bf16 %v23, %v22
    %v39 = vpack.c.bf16 %v25, %v24
    %v40 = vpack.c.bf16 %v27, %v26
    %v41 = vpack.c.bf16 %v29, %v28
    %v42 = vpack.c.bf16 %v31, %v30
    %v43 = vpack.c.bf16 %v33, %v32
    %v44 = vpack.c.bf16 %v35, %v34
    %v45 = vpack.c.bf16 %v37, %v36
    %v46 = vld [vmem:[%s1] sm:$0xff]
    %v47 = vld [vmem:[%s1 + $0x8] sm:$0xff]
    %v48 = vld [vmem:[%s1 + $0x10] sm:$0xff]
    %v49 = vld [vmem:[%s1 + $0x18] sm:$0xff]
    %v50 = vld [vmem:[%s2] sm:$0x3]
    %v52 = vlaneseq
    %v53 = vshrl.u32 %v52, 7
    %v54 = vsub.s32 0, %v53
    %v55 = vrot.slane %v50, %v54
    %v56 = vlaneseq
    %v57 = vshrl.u32 %v56, 7
    %v58 = vsub.s32 1, %v57
    %v59 = vrot.slane %v50, %v58
    %v66 = vunpack.c.l.b16 %v46
    %v67 = vunpack.c.h.b16 %v46
    %v68 = vunpack.c.l.b16 %v47
    %v69 = vunpack.c.h.b16 %v47
    %v70 = vunpack.c.l.b16 %v48
    %v71 = vunpack.c.h.b16 %v48
    %v72 = vunpack.c.l.b16 %v49
    %v73 = vunpack.c.h.b16 %v49
    %v74 = vpack.c.b16 %v68, %v66
    %v75 = vpack.c.b16 %v69, %v67
    %v76 = vpack.c.b16 %v72, %v70
    %v77 = vpack.c.b16 %v73, %v71
    %vm82 = vcmask 261120
    %v84 = vsel %vm82, %v38, 0
    %v87 = vsel %vm82, %v39, 0
    %v90 = vsel %vm82, %v40, 0
    %v93 = vsel %vm82, %v41, 0
    %v96 = vsel %vm82, %v42, 0
    %v99 = vsel %vm82, %v43, 0
    %v102 = vsel %vm82, %v44, 0
    %v105 = vsel %vm82, %v45, 0
    %107 = vmatprep.subr.bf16.mxu0 0
    %108 = vmatpush1.bf16.msra.mxu0 0
    %109 = vmatprep.subr.bf16.mxu0 0
    %110 = vmatpush1.bf16.msra.mxu0 0
    %111 = vmatprep.subr.bf16.mxu0 0
    %112 = vmatpush1.bf16.msra.mxu0 0
    %113 = vmatprep.subr.bf16.mxu0 0
    %114 = vmatpush1.bf16.msra.mxu0 0
    %115 = vmatprep.subr.bf16.mxu0 0
    %116 = vmatpush1.bf16.msra.mxu0 0
    %117 = vmatprep.subr.bf16.mxu0 0
    %118 = vmatpush1.bf16.msra.mxu0 0
    %119 = vmatprep.subr.bf16.mxu0 %v77
    %120 = vmatpush1.bf16.msra.mxu0 %v76
    %121 = vmatprep.subr.bf16.mxu0 %v75
    %122 = vmatpush1.bf16.msra.mxu0 %v74
    %123 = vmatprep.subr.bf16.mxu0 0
    %124 = vmatpush2.bf16.msra.mxu0 0
    %125 = vmatprep.subr.bf16.mxu0 0
    %126 = vmatpush2.bf16.msra.mxu0 0
    %127 = vmatprep.subr.bf16.mxu0 0
    %128 = vmatpush2.bf16.msra.mxu0 0
    %129 = vmatprep.subr.bf16.mxu0 0
    %130 = vmatpush2.bf16.msra.mxu0 0
    %131 = vmatprep.subr.bf16.mxu0 0
    %132 = vmatpush2.bf16.msra.mxu0 0
    %133 = vmatprep.subr.bf16.mxu0 0
    %134 = vmatpush2.bf16.msra.mxu0 0
    %135 = vmatprep.subr.bf16.mxu0 0
    %136 = vmatpush2.bf16.msra.mxu0 0
    %137 = vmatprep.subr.bf16.mxu0 0
    %138 = vmatpush2.bf16.msra.mxu0 0
    %139 = vmatprep.mubr.bf16.mxu0 0
    %140 = vmatmul.mubr.bf16.gmra.mxu0 %v84
    %v141 = vpop.f32.mrf.mxu0
    %v142 = vadd.f32 %v55, %v141
    %v143 = vpop.f32.mrf.mxu0
    %v144 = vadd.f32 %v59, %v143
    %v145 = vpop.f32.mrf.mxu0
    %v146 = vadd.f32 %v55, %v145
    %v147 = vpop.f32.mrf.mxu0
    %v148 = vadd.f32 %v59, %v147
    %149 = vmatprep.mubr.bf16.mxu0 0
    %150 = vmatmul.mubr.bf16.gmra.mxu0 %v87
    %v151 = vpop.f32.mrf.mxu0
    %v152 = vadd.f32 %v55, %v151
    %v153 = vpop.f32.mrf.mxu0
    %v154 = vadd.f32 %v59, %v153
    %v155 = vpop.f32.mrf.mxu0
    %v156 = vadd.f32 %v55, %v155
    %v157 = vpop.f32.mrf.mxu0
    %v158 = vadd.f32 %v59, %v157
    %159 = vmatprep.mubr.bf16.mxu0 0
    %160 = vmatmul.mubr.bf16.gmra.mxu0 %v90
    %v161 = vpop.f32.mrf.mxu0
    %v162 = vadd.f32 %v55, %v161
    %v163 = vpop.f32.mrf.mxu0
    %v164 = vadd.f32 %v59, %v163
    %v165 = vpop.f32.mrf.mxu0
    %v166 = vadd.f32 %v55, %v165
    %v167 = vpop.f32.mrf.mxu0
    %v168 = vadd.f32 %v59, %v167
    %169 = vmatprep.mubr.bf16.mxu0 0
    %170 = vmatmul.mubr.bf16.gmra.mxu0 %v93
    %v171 = vpop.f32.mrf.mxu0
    %v172 = vadd.f32 %v55, %v171
    %v173 = vpop.f32.mrf.mxu0
    %v174 = vadd.f32 %v59, %v173
    %v175 = vpop.f32.mrf.mxu0
    %v176 = vadd.f32 %v55, %v175
    %v177 = vpop.f32.mrf.mxu0
    %v178 = vadd.f32 %v59, %v177
    %179 = vmatprep.mubr.bf16.mxu0 0
    %180 = vmatmul.mubr.bf16.gmra.mxu0 %v96
    %v181 = vpop.f32.mrf.mxu0
    %v182 = vadd.f32 %v55, %v181
    %v183 = vpop.f32.mrf.mxu0
    %v184 = vadd.f32 %v59, %v183
    %v185 = vpop.f32.mrf.mxu0
    %v186 = vadd.f32 %v55, %v185
    %v187 = vpop.f32.mrf.mxu0
    %v188 = vadd.f32 %v59, %v187
    %189 = vmatprep.mubr.bf16.mxu0 0
    %190 = vmatmul.mubr.bf16.gmra.mxu0 %v99
    %v191 = vpop.f32.mrf.mxu0
    %v192 = vadd.f32 %v55, %v191
    %v193 = vpop.f32.mrf.mxu0
    %v194 = vadd.f32 %v59, %v193
    %v195 = vpop.f32.mrf.mxu0
    %v196 = vadd.f32 %v55, %v195
    %v197 = vpop.f32.mrf.mxu0
    %v198 = vadd.f32 %v59, %v197
    %199 = vmatprep.mubr.bf16.mxu0 0
    %200 = vmatmul.mubr.bf16.gmra.mxu0 %v102
    %v201 = vpop.f32.mrf.mxu0
    %v202 = vadd.f32 %v55, %v201
    %v203 = vpop.f32.mrf.mxu0
    %v204 = vadd.f32 %v59, %v203
    %v205 = vpop.f32.mrf.mxu0
    %v206 = vadd.f32 %v55, %v205
    %v207 = vpop.f32.mrf.mxu0
    %v208 = vadd.f32 %v59, %v207
    %209 = vmatprep.mubr.bf16.mxu0 0
    %210 = vmatmul.mubr.bf16.gmra.mxu0 %v105
    %v211 = vpop.f32.mrf.mxu0
    %v212 = vadd.f32 %v55, %v211
    %v213 = vpop.f32.mrf.mxu0
    %v214 = vadd.f32 %v59, %v213
    %v215 = vpop.f32.mrf.mxu0
    %v216 = vadd.f32 %v55, %v215
    %v217 = vpop.f32.mrf.mxu0
    %v218 = vadd.f32 %v59, %v217
    %219 = vdwg.mxu0
    %v220 = vtanh.pop %v142
    %v221 = vtanh.pop %v146
    %v222 = vtanh.pop %v152
    %v223 = vtanh.pop %v156
    %v224 = vtanh.pop %v162
    %v225 = vtanh.pop %v166
    %v226 = vtanh.pop %v172
    %v227 = vtanh.pop %v176
    %v228 = vtanh.pop %v182
    %v229 = vtanh.pop %v186
    %v230 = vtanh.pop %v192
    %v231 = vtanh.pop %v196
    %v232 = vtanh.pop %v202
    %v233 = vtanh.pop %v206
    %v234 = vtanh.pop %v212
    %v235 = vtanh.pop %v216
    %vm236 = vcmp.ge.f32.partialorder %v144, 0.0
    %vm237 = vcmp.ge.f32.partialorder %v148, 0.0
    %vm238 = vcmp.ge.f32.partialorder %v154, 0.0
    %vm239 = vcmp.ge.f32.partialorder %v158, 0.0
    %vm240 = vcmp.ge.f32.partialorder %v164, 0.0
    %vm241 = vcmp.ge.f32.partialorder %v168, 0.0
    %vm242 = vcmp.ge.f32.partialorder %v174, 0.0
    %vm243 = vcmp.ge.f32.partialorder %v178, 0.0
    %vm244 = vcmp.ge.f32.partialorder %v184, 0.0
    %vm245 = vcmp.ge.f32.partialorder %v188, 0.0
    %vm246 = vcmp.ge.f32.partialorder %v194, 0.0
    %vm247 = vcmp.ge.f32.partialorder %v198, 0.0
    %vm248 = vcmp.ge.f32.partialorder %v204, 0.0
    %vm249 = vcmp.ge.f32.partialorder %v208, 0.0
    %vm250 = vcmp.ge.f32.partialorder %v214, 0.0
    %vm251 = vcmp.ge.f32.partialorder %v218, 0.0
    %v252 = vmul.f32 %v144, 0.01
    %v253 = vmul.f32 %v148, 0.01
    %v254 = vmul.f32 %v154, 0.01
    %v255 = vmul.f32 %v158, 0.01
    %v256 = vmul.f32 %v164, 0.01
    %v257 = vmul.f32 %v168, 0.01
    %v258 = vmul.f32 %v174, 0.01
    %v259 = vmul.f32 %v178, 0.01
    %v260 = vmul.f32 %v184, 0.01
    %v261 = vmul.f32 %v188, 0.01
    %v262 = vmul.f32 %v194, 0.01
    %v263 = vmul.f32 %v198, 0.01
    %v264 = vmul.f32 %v204, 0.01
    %v265 = vmul.f32 %v208, 0.01
    %v266 = vmul.f32 %v214, 0.01
    %v267 = vmul.f32 %v218, 0.01
    %v268 = vsel %vm236, %v144, %v252
    %v269 = vsel %vm237, %v148, %v253
    %v270 = vsel %vm238, %v154, %v254
    %v271 = vsel %vm239, %v158, %v255
    %v272 = vsel %vm240, %v164, %v256
    %v273 = vsel %vm241, %v168, %v257
    %v274 = vsel %vm242, %v174, %v258
    %v275 = vsel %vm243, %v178, %v259
    %v276 = vsel %vm244, %v184, %v260
    %v277 = vsel %vm245, %v188, %v261
    %v278 = vsel %vm246, %v194, %v262
    %v279 = vsel %vm247, %v198, %v263
    %v280 = vsel %vm248, %v204, %v264
    %v281 = vsel %vm249, %v208, %v265
    %v282 = vsel %vm250, %v214, %v266
    %v283 = vsel %vm251, %v218, %v267
    %v284 = vmul.f32 %v220, %v268
    %v285 = vmul.f32 %v221, %v269
    %v286 = vmul.f32 %v222, %v270
    %v287 = vmul.f32 %v223, %v271
    %v288 = vmul.f32 %v224, %v272
    %v289 = vmul.f32 %v225, %v273
    %v290 = vmul.f32 %v226, %v274
    %v291 = vmul.f32 %v227, %v275
    %v292 = vmul.f32 %v228, %v276
    %v293 = vmul.f32 %v229, %v277
    %v294 = vmul.f32 %v230, %v278
    %v295 = vmul.f32 %v231, %v279
    %v296 = vmul.f32 %v232, %v280
    %v297 = vmul.f32 %v233, %v281
    %v298 = vmul.f32 %v234, %v282
    %v299 = vmul.f32 %v235, %v283
    %v300 = vld [vmem:[%s3] sm:$0x1]
    %v301 = vpack.c.bf16 %v285, %v284
    %v302 = vpack.c.bf16 %v287, %v286
    %v303 = vpack.c.bf16 %v289, %v288
    %v304 = vpack.c.bf16 %v291, %v290
    %v305 = vpack.c.bf16 %v293, %v292
    %v306 = vpack.c.bf16 %v295, %v294
    %v307 = vpack.c.bf16 %v297, %v296
    %v308 = vpack.c.bf16 %v299, %v298
    %309 = vmatprep.subr.bf16.mxu0 0
    %310 = vmatpush1.bf16.xpose.msra.mxu0 %v308
    %311 = vmatprep.subr.bf16.mxu0 0
    %312 = vmatpush1.bf16.xpose.msra.mxu0 %v307
    %313 = vmatprep.subr.bf16.mxu0 0
    %314 = vmatpush1.bf16.xpose.msra.mxu0 %v306
    %315 = vmatprep.subr.bf16.mxu0 0
    %316 = vmatpush1.bf16.xpose.msra.mxu0 %v305
    %317 = vmatprep.subr.bf16.mxu0 0
    %318 = vmatpush1.bf16.xpose.msra.mxu0 %v304
    %319 = vmatprep.subr.bf16.mxu0 0
    %320 = vmatpush1.bf16.xpose.msra.mxu0 %v303
    %321 = vmatprep.subr.bf16.mxu0 0
    %322 = vmatpush1.bf16.xpose.msra.mxu0 %v302
    %323 = vmatprep.subr.bf16.mxu0 0
    %324 = vmatpush1.bf16.xpose.msra.mxu0 %v301
    %325 = vmatprep.subr.bf16.mxu0 0
    %326 = vmatpush2.bf16.xpose.msra.mxu0 0
    %327 = vmatprep.subr.bf16.mxu0 0
    %328 = vmatpush2.bf16.xpose.msra.mxu0 0
    %329 = vmatprep.subr.bf16.mxu0 0
    %330 = vmatpush2.bf16.xpose.msra.mxu0 0
    %331 = vmatprep.subr.bf16.mxu0 0
    %332 = vmatpush2.bf16.xpose.msra.mxu0 0
    %333 = vmatprep.subr.bf16.mxu0 0
    %334 = vmatpush2.bf16.xpose.msra.mxu0 0
    %335 = vmatprep.subr.bf16.mxu0 0
    %336 = vmatpush2.bf16.xpose.msra.mxu0 0
    %337 = vmatprep.subr.bf16.mxu0 0
    %338 = vmatpush2.bf16.xpose.msra.mxu0 0
    %339 = vmatprep.subr.bf16.mxu0 0
    %340 = vmatpush2.bf16.xpose.msra.mxu0 0
    %341 = vmatprep.mubr.bf16.mxu0 0
    %342 = vmatmul.mubr.bf16.gmra.mxu0 %v300
    %v343 = vpop.f32.mrf.mxu0
    %v344 = vadd.f32 0.0, %v343
    %v345 = vpop.f32.mrf.mxu0
    %v346 = vpop.f32.mrf.mxu0
    %v347 = vpop.f32.mrf.mxu0
    %348 = vdwg.mxu0
    %v349 = vmul.f32 %v284, %v284
    %v350 = vmul.f32 %v285, %v285
    %v351 = vmul.f32 %v286, %v286
    %v352 = vmul.f32 %v287, %v287
    %v353 = vmul.f32 %v288, %v288
    %v354 = vmul.f32 %v289, %v289
    %v355 = vmul.f32 %v290, %v290
    %v356 = vmul.f32 %v291, %v291
    %v357 = vmul.f32 %v292, %v292
    %v358 = vmul.f32 %v293, %v293
    %v359 = vmul.f32 %v294, %v294
    %v360 = vmul.f32 %v295, %v295
    %v361 = vmul.f32 %v296, %v296
    %v362 = vmul.f32 %v297, %v297
    %v363 = vmul.f32 %v298, %v298
    %v364 = vmul.f32 %v299, %v299
    %365 = vmatprep.subr.mxu0 0.0
    %366 = vmatpush1.xpose.msra.mxu0 %v364
    %367 = vmatprep.subr.mxu0 0.0
    %368 = vmatpush1.xpose.msra.mxu0 %v363
    %369 = vmatprep.subr.mxu0 0.0
    %370 = vmatpush1.xpose.msra.mxu0 %v362
    %371 = vmatprep.subr.mxu0 0.0
    %372 = vmatpush1.xpose.msra.mxu0 %v361
    %373 = vmatprep.subr.mxu0 0.0
    %374 = vmatpush1.xpose.msra.mxu0 %v360
    %375 = vmatprep.subr.mxu0 0.0
    %376 = vmatpush1.xpose.msra.mxu0 %v359
    %377 = vmatprep.subr.mxu0 0.0
    %378 = vmatpush1.xpose.msra.mxu0 %v358
    %379 = vmatprep.subr.mxu0 0.0
    %380 = vmatpush1.xpose.msra.mxu0 %v357
    %381 = vmatprep.subr.mxu0 0.0
    %382 = vmatpush1.xpose.msra.mxu0 %v356
    %383 = vmatprep.subr.mxu0 0.0
    %384 = vmatpush1.xpose.msra.mxu0 %v355
    %385 = vmatprep.subr.mxu0 0.0
    %386 = vmatpush1.xpose.msra.mxu0 %v354
    %387 = vmatprep.subr.mxu0 0.0
    %388 = vmatpush1.xpose.msra.mxu0 %v353
    %389 = vmatprep.subr.mxu0 0.0
    %390 = vmatpush1.xpose.msra.mxu0 %v352
    %391 = vmatprep.subr.mxu0 0.0
    %392 = vmatpush1.xpose.msra.mxu0 %v351
    %393 = vmatprep.subr.mxu0 0.0
    %394 = vmatpush1.xpose.msra.mxu0 %v350
    %395 = vmatprep.subr.mxu0 0.0
    %396 = vmatpush1.xpose.msra.mxu0 %v349
    %397 = vmatprep.subr.mxu0 0.0
    %398 = vmatpush2.xpose.msra.mxu0 0.0
    %399 = vmatprep.subr.mxu0 0.0
    %400 = vmatpush2.xpose.msra.mxu0 0.0
    %401 = vmatprep.subr.mxu0 0.0
    %402 = vmatpush2.xpose.msra.mxu0 0.0
    %403 = vmatprep.subr.mxu0 0.0
    %404 = vmatpush2.xpose.msra.mxu0 0.0
    %405 = vmatprep.subr.mxu0 0.0
    %406 = vmatpush2.xpose.msra.mxu0 0.0
    %407 = vmatprep.subr.mxu0 0.0
    %408 = vmatpush2.xpose.msra.mxu0 0.0
    %409 = vmatprep.subr.mxu0 0.0
    %410 = vmatpush2.xpose.msra.mxu0 0.0
    %411 = vmatprep.subr.mxu0 0.0
    %412 = vmatpush2.xpose.msra.mxu0 0.0
    %413 = vmatprep.subr.mxu0 0.0
    %414 = vmatpush2.xpose.msra.mxu0 0.0
    %415 = vmatprep.subr.mxu0 0.0
    %416 = vmatpush2.xpose.msra.mxu0 0.0
    %417 = vmatprep.subr.mxu0 0.0
    %418 = vmatpush2.xpose.msra.mxu0 0.0
    %419 = vmatprep.subr.mxu0 0.0
    %420 = vmatpush2.xpose.msra.mxu0 0.0
    %421 = vmatprep.subr.mxu0 0.0
    %422 = vmatpush2.xpose.msra.mxu0 0.0
    %423 = vmatprep.subr.mxu0 0.0
    %424 = vmatpush2.xpose.msra.mxu0 0.0
    %425 = vmatprep.subr.mxu0 0.0
    %426 = vmatpush2.xpose.msra.mxu0 0.0
    %427 = vmatprep.subr.mxu0 0.0
    %428 = vmatpush2.xpose.msra.mxu0 0.0
    %429 = vmatprep.mubr.f32.mxu0 0.0
    %430 = vmatmul.mubr.f32.gmra.mxu0 1.0
    %v431 = vpop.f32.mrf.mxu0
    %v432 = vadd.f32 0.0, %v431
    %v433 = vpop.f32.mrf.mxu0
    %434 = vdwg.mxu0
    %v435 = vmax.f32 %v432, 1e-24
    %v436 = vrsqrt.pop %v435
    %v437 = vlaneseq
    %v438 = vshrl.u32 %v437, 7
    %v439 = vsub.s32 0, %v438
    %v440 = vrot.slane %v436, %v439
    %v441 = vmul.f32 %v344, %v440
    %v442 = vld [vmem:[%s4] sm:$0x3]
    %444 = vset.pattern.permute.xlu0 0
    %445 = vperm.xlu0 %444, %v442
    %v446 = vpop.permute.xlu0 %445
    %v448 = vadd.f32 %v441, %v446
    %v450 = vrot.slane %v448, 7
    %vm452 = vcmp.gt.f32.partialorder %v448, %v450
    %v453 = vsel %vm452, 0.0, 1.0
    %454 = vst [vmem:[#allocation2 - $0x1] sm:$0x2] %v453
    %v455 = vsel %vm452, 1.0, 0.0
    %456 = vst [vmem:[#allocation2] sm:$0x2] %v455
    %v457 = vrot.slane %v448, 1
    %v459 = vmax.f32 %v448, %v457
    %v460 = vsub.f32 %v448, %v459
    %v461 = vmul.f32 %v460, 1.442695
    %v462 = vpow.pop %v461
    %v464 = vrot.slane %v459, 7
    %v466 = vsub.f32 %v448, %v464
    %v467 = vmul.f32 %v466, 1.442695
    %v468 = vpow.pop %v467
    %v470 = vrot.slane %v468, 1
    %v472 = vadd.f32 %v462, %v470
    %v473 = vrcp.pop %v472
    %v474 = vmul.f32 %v462, %v473
    %475 = vst [vmem:[#allocation2 + $0x2] sm:$0x1] %v474
    %v477 = vrot.slane %v473, 7
    %v479 = vmul.f32 %v468, %v477
    %480 = vst [vmem:[#allocation2 + $0x2] sm:$0x2] %v479
    // Predicated region
    $region22: #{tpu_custom_call.1} parent=1 // pred_check
      _
    $region23: #{tpu_custom_call.1} parent=1 // pred_check_branch
      %482 = sbr.rel (0) target = $region25
    $region24: #{tpu_custom_call.1} parent=1 // pred_region
      %s484 = ssub.s32 64, 64
      %485 = vsyncadd [#allocation3], %s484
      %s487 = sshll.u32 [#allocation2], 4
      %s488 = int_to_ptr.vmem [resolvable:$true] %s487
      %490 = dma.vmem_to_hbm [thread:$0]  %s488, 64, %s5, [#allocation3]
    $region25: #{tpu_custom_call.1} parent=1 // pred_fallthru
      _
    // Predicated region
    $region26: #{tpu_custom_call.1} parent=1 // pred_check
      _
    $region27: #{tpu_custom_call.1} parent=1 // pred_check_branch
      %492 = sbr.rel (0) target = $region29
    $region28: #{tpu_custom_call.1} parent=1 // pred_region
      %493 = dma.done [#allocation3], 64
    $region29: #{tpu_custom_call.1} parent=1 // pred_fallthru
      _
    %494 = vsyncpa [#allocation3], 1

// kernel: tpu_custom_call.1
$region0: #{tpu_custom_call.1}
  #allocation0 [shape = 'u32[]', space=smem, size = 0x4, offset = 0x4, fixed_abs, tag = 'smem constant byte address 0x4 - core index']
  #allocation1 [shape = 'u32[144,128]{1,0:T(1,128)}', space=vmem, size = 0x12000, scoped, tag = 'internal scratch']
  %s0 = inlined_call_operand.vmem [shape: f32[128,32], index: 0, kind: input, shape index: {}]
  %s1 = inlined_call_operand.vmem [shape: bf16[32,256], index: 1, kind: input, shape index: {}]
  %s2 = inlined_call_operand.vmem [shape: f32[1,256], index: 2, kind: input, shape index: {}]
  %s3 = inlined_call_operand.vmem [shape: bf16[2,128], index: 3, kind: input, shape index: {}]
  %s4 = inlined_call_operand.vmem [shape: f32[2,1], index: 4, kind: input, shape index: {}]
  %s5 = inlined_call_operand.hbm [shape: f32[4,128], index: 5, kind: output, shape index: {}]
  %s6 = sld [smem:[#allocation0]]
  $region30: #{tpu_custom_call.1} parent=0
    _
  %s8 = ssub.s32 1, %s6
  %s9 = scalar_select 0, %s8, %s6
  $region1: #{tpu_custom_call.1} parent=0
    #allocation2 [shape = 'u8[2048]{0}', space=vmem, size = 0x800, scoped, tag = 'output window, operand 0, single buffered']
    #allocation3 [shape = 's32[1]{0}', space=sflag, size = 0x4, scoped, tag = 'scoped memory for tpu_custom_call.1']
    %10 = vsyncpa [#allocation3], 0
    // Predicated region
    $region2: #{tpu_custom_call.1} parent=1 // pred_check
      _
    $region3: #{tpu_custom_call.1} parent=1 // pred_check_branch
      %12 = sbr.rel (0) target = $region5
    $region4: #{tpu_custom_call.1} parent=1 // pred_region
      _
    $region5: #{tpu_custom_call.1} parent=1 // pred_fallthru
      _
    // Predicated region
    $region6: #{tpu_custom_call.1} parent=1 // pred_check
      _
    $region7: #{tpu_custom_call.1} parent=1 // pred_check_branch
      %14 = sbr.rel (0) target = $region9
    $region8: #{tpu_custom_call.1} parent=1 // pred_region
      _
    $region9: #{tpu_custom_call.1} parent=1 // pred_fallthru
      _
    // Predicated region
    $region10: #{tpu_custom_call.1} parent=1 // pred_check
      _
    $region11: #{tpu_custom_call.1} parent=1 // pred_check_branch
      %16 = sbr.rel (0) target = $region13
    $region12: #{tpu_custom_call.1} parent=1 // pred_region
      _
    $region13: #{tpu_custom_call.1} parent=1 // pred_fallthru
      _
    // Predicated region
    $region14: #{tpu_custom_call.1} parent=1 // pred_check
      _
    $region15: #{tpu_custom_call.1} parent=1 // pred_check_branch
      %18 = sbr.rel (0) target = $region17
    $region16: #{tpu_custom_call.1} parent=1 // pred_region
      _
    $region17: #{tpu_custom_call.1} parent=1 // pred_fallthru
      _
    // Predicated region
    $region18: #{tpu_custom_call.1} parent=1 // pred_check
      _
    $region19: #{tpu_custom_call.1} parent=1 // pred_check_branch
      %20 = sbr.rel (0) target = $region21
    $region20: #{tpu_custom_call.1} parent=1 // pred_region
      _
    $region21: #{tpu_custom_call.1} parent=1 // pred_fallthru
      _
    %v22 = vld [vmem:[%s0] sm:$0xff]
    %v23 = vld [vmem:[%s0 + $0x8] sm:$0xff]
    %v24 = vld [vmem:[%s0 + $0x10] sm:$0xff]
    %v25 = vld [vmem:[%s0 + $0x18] sm:$0xff]
    %v26 = vld [vmem:[%s0 + $0x20] sm:$0xff]
    %v27 = vld [vmem:[%s0 + $0x28] sm:$0xff]
    %v28 = vld [vmem:[%s0 + $0x30] sm:$0xff]
    %v29 = vld [vmem:[%s0 + $0x38] sm:$0xff]
    %v30 = vld [vmem:[%s0 + $0x40] sm:$0xff]
    %v31 = vld [vmem:[%s0 + $0x48] sm:$0xff]
    %v32 = vld [vmem:[%s0 + $0x50] sm:$0xff]
    %v33 = vld [vmem:[%s0 + $0x58] sm:$0xff]
    %v34 = vld [vmem:[%s0 + $0x60] sm:$0xff]
    %v35 = vld [vmem:[%s0 + $0x68] sm:$0xff]
    %v36 = vld [vmem:[%s0 + $0x70] sm:$0xff]
    %v37 = vld [vmem:[%s0 + $0x78] sm:$0xff]
    %v38 = vpack.c.bf16 %v23, %v22
    %v39 = vpack.c.bf16 %v25, %v24
    %v40 = vpack.c.bf16 %v27, %v26
    %v41 = vpack.c.bf16 %v29, %v28
    %v42 = vpack.c.bf16 %v31, %v30
    %v43 = vpack.c.bf16 %v33, %v32
    %v44 = vpack.c.bf16 %v35, %v34
    %v45 = vpack.c.bf16 %v37, %v36
    %v46 = vld [vmem:[%s1] sm:$0xff]
    %v47 = vld [vmem:[%s1 + $0x8] sm:$0xff]
    %v48 = vld [vmem:[%s1 + $0x10] sm:$0xff]
    %v49 = vld [vmem:[%s1 + $0x18] sm:$0xff]
    %v50 = vld [vmem:[%s2] sm:$0x3]
    %v52 = vlaneseq
    %v53 = vshrl.u32 %v52, 7
    %v54 = vsub.s32 0, %v53
    %v55 = vrot.slane %v50, %v54
    %v56 = vlaneseq
    %v57 = vshrl.u32 %v56, 7
    %v58 = vsub.s32 1, %v57
    %v59 = vrot.slane %v50, %v58
    %v66 = vunpack.c.l.b16 %v46
    %v67 = vunpack.c.h.b16 %v46
    %v68 = vunpack.c.l.b16 %v47
    %v69 = vunpack.c.h.b16 %v47
    %v70 = vunpack.c.l.b16 %v48
    %v71 = vunpack.c.h.b16 %v48
    %v72 = vunpack.c.l.b16 %v49
    %v73 = vunpack.c.h.b16 %v49
    %v74 = vpack.c.b16 %v68, %v66
    %v75 = vpack.c.b16 %v69, %v67
    %v76 = vpack.c.b16 %v72, %v70
    %v77 = vpack.c.b16 %v73, %v71
    %vm82 = vcmask 261120
    %v84 = vsel %vm82, %v38, 0
    %v87 = vsel %vm82, %v39, 0
    %v90 = vsel %vm82, %v40, 0
    %v93 = vsel %vm82, %v41, 0
    %v96 = vsel %vm82, %v42, 0
    %v99 = vsel %vm82, %v43, 0
    %v102 = vsel %vm82, %v44, 0
    %v105 = vsel %vm82, %v45, 0
    %107 = vmatprep.subr.bf16.mxu0 0
    %108 = vmatpush1.bf16.msra.mxu0 0
    %109 = vmatprep.subr.bf16.mxu0 0
    %110 = vmatpush1.bf16.msra.mxu0 0
    %111 = vmatprep.subr.bf16.mxu0 0
    %112 = vmatpush1.bf16.msra.mxu0 0
    %113 = vmatprep.subr.bf16.mxu0 0
    %114 = vmatpush1.bf16.msra.mxu0 0
    %115 = vmatprep.subr.bf16.mxu0 0
    %116 = vmatpush1.bf16.msra.mxu0 0
    %117 = vmatprep.subr.bf16.mxu0 0
    %118 = vmatpush1.bf16.msra.mxu0 0
    %119 = vmatprep.subr.bf16.mxu0 %v77
    %120 = vmatpush1.bf16.msra.mxu0 %v76
    %121 = vmatprep.subr.bf16.mxu0 %v75
    %122 = vmatpush1.bf16.msra.mxu0 %v74
    %123 = vmatprep.subr.bf16.mxu0 0
    %124 = vmatpush2.bf16.msra.mxu0 0
    %125 = vmatprep.subr.bf16.mxu0 0
    %126 = vmatpush2.bf16.msra.mxu0 0
    %127 = vmatprep.subr.bf16.mxu0 0
    %128 = vmatpush2.bf16.msra.mxu0 0
    %129 = vmatprep.subr.bf16.mxu0 0
    %130 = vmatpush2.bf16.msra.mxu0 0
    %131 = vmatprep.subr.bf16.mxu0 0
    %132 = vmatpush2.bf16.msra.mxu0 0
    %133 = vmatprep.subr.bf16.mxu0 0
    %134 = vmatpush2.bf16.msra.mxu0 0
    %135 = vmatprep.subr.bf16.mxu0 0
    %136 = vmatpush2.bf16.msra.mxu0 0
    %137 = vmatprep.subr.bf16.mxu0 0
    %138 = vmatpush2.bf16.msra.mxu0 0
    %139 = vmatprep.mubr.bf16.mxu0 0
    %140 = vmatmul.mubr.bf16.gmra.mxu0 %v84
    %v141 = vpop.f32.mrf.mxu0
    %v142 = vadd.f32 %v55, %v141
    %v143 = vpop.f32.mrf.mxu0
    %v144 = vadd.f32 %v59, %v143
    %v145 = vpop.f32.mrf.mxu0
    %v146 = vadd.f32 %v55, %v145
    %v147 = vpop.f32.mrf.mxu0
    %v148 = vadd.f32 %v59, %v147
    %149 = vmatprep.mubr.bf16.mxu0 0
    %150 = vmatmul.mubr.bf16.gmra.mxu0 %v87
    %v151 = vpop.f32.mrf.mxu0
    %v152 = vadd.f32 %v55, %v151
    %v153 = vpop.f32.mrf.mxu0
    %v154 = vadd.f32 %v59, %v153
    %v155 = vpop.f32.mrf.mxu0
    %v156 = vadd.f32 %v55, %v155
    %v157 = vpop.f32.mrf.mxu0
    %v158 = vadd.f32 %v59, %v157
    %159 = vmatprep.mubr.bf16.mxu0 0
    %160 = vmatmul.mubr.bf16.gmra.mxu0 %v90
    %v161 = vpop.f32.mrf.mxu0
    %v162 = vadd.f32 %v55, %v161
    %v163 = vpop.f32.mrf.mxu0
    %v164 = vadd.f32 %v59, %v163
    %v165 = vpop.f32.mrf.mxu0
    %v166 = vadd.f32 %v55, %v165
    %v167 = vpop.f32.mrf.mxu0
    %v168 = vadd.f32 %v59, %v167
    %169 = vmatprep.mubr.bf16.mxu0 0
    %170 = vmatmul.mubr.bf16.gmra.mxu0 %v93
    %v171 = vpop.f32.mrf.mxu0
    %v172 = vadd.f32 %v55, %v171
    %v173 = vpop.f32.mrf.mxu0
    %v174 = vadd.f32 %v59, %v173
    %v175 = vpop.f32.mrf.mxu0
    %v176 = vadd.f32 %v55, %v175
    %v177 = vpop.f32.mrf.mxu0
    %v178 = vadd.f32 %v59, %v177
    %179 = vmatprep.mubr.bf16.mxu0 0
    %180 = vmatmul.mubr.bf16.gmra.mxu0 %v96
    %v181 = vpop.f32.mrf.mxu0
    %v182 = vadd.f32 %v55, %v181
    %v183 = vpop.f32.mrf.mxu0
    %v184 = vadd.f32 %v59, %v183
    %v185 = vpop.f32.mrf.mxu0
    %v186 = vadd.f32 %v55, %v185
    %v187 = vpop.f32.mrf.mxu0
    %v188 = vadd.f32 %v59, %v187
    %189 = vmatprep.mubr.bf16.mxu0 0
    %190 = vmatmul.mubr.bf16.gmra.mxu0 %v99
    %v191 = vpop.f32.mrf.mxu0
    %v192 = vadd.f32 %v55, %v191
    %v193 = vpop.f32.mrf.mxu0
    %v194 = vadd.f32 %v59, %v193
    %v195 = vpop.f32.mrf.mxu0
    %v196 = vadd.f32 %v55, %v195
    %v197 = vpop.f32.mrf.mxu0
    %v198 = vadd.f32 %v59, %v197
    %199 = vmatprep.mubr.bf16.mxu0 0
    %200 = vmatmul.mubr.bf16.gmra.mxu0 %v102
    %v201 = vpop.f32.mrf.mxu0
    %v202 = vadd.f32 %v55, %v201
    %v203 = vpop.f32.mrf.mxu0
    %v204 = vadd.f32 %v59, %v203
    %v205 = vpop.f32.mrf.mxu0
    %v206 = vadd.f32 %v55, %v205
    %v207 = vpop.f32.mrf.mxu0
    %v208 = vadd.f32 %v59, %v207
    %209 = vmatprep.mubr.bf16.mxu0 0
    %210 = vmatmul.mubr.bf16.gmra.mxu0 %v105
    %v211 = vpop.f32.mrf.mxu0
    %v212 = vadd.f32 %v55, %v211
    %v213 = vpop.f32.mrf.mxu0
    %v214 = vadd.f32 %v59, %v213
    %v215 = vpop.f32.mrf.mxu0
    %v216 = vadd.f32 %v55, %v215
    %v217 = vpop.f32.mrf.mxu0
    %v218 = vadd.f32 %v59, %v217
    %219 = vdwg.mxu0
    %v220 = vtanh.pop %v142
    %v221 = vtanh.pop %v146
    %v222 = vtanh.pop %v152
    %v223 = vtanh.pop %v156
    %v224 = vtanh.pop %v162
    %v225 = vtanh.pop %v166
    %v226 = vtanh.pop %v172
    %v227 = vtanh.pop %v176
    %v228 = vtanh.pop %v182
    %v229 = vtanh.pop %v186
    %v230 = vtanh.pop %v192
    %v231 = vtanh.pop %v196
    %v232 = vtanh.pop %v202
    %v233 = vtanh.pop %v206
    %v234 = vtanh.pop %v212
    %v235 = vtanh.pop %v216
    %vm236 = vcmp.ge.f32.partialorder %v144, 0.0
    %vm237 = vcmp.ge.f32.partialorder %v148, 0.0
    %vm238 = vcmp.ge.f32.partialorder %v154, 0.0
    %vm239 = vcmp.ge.f32.partialorder %v158, 0.0
    %vm240 = vcmp.ge.f32.partialorder %v164, 0.0
    %vm241 = vcmp.ge.f32.partialorder %v168, 0.0
    %vm242 = vcmp.ge.f32.partialorder %v174, 0.0
    %vm243 = vcmp.ge.f32.partialorder %v178, 0.0
    %vm244 = vcmp.ge.f32.partialorder %v184, 0.0
    %vm245 = vcmp.ge.f32.partialorder %v188, 0.0
    %vm246 = vcmp.ge.f32.partialorder %v194, 0.0
    %vm247 = vcmp.ge.f32.partialorder %v198, 0.0
    %vm248 = vcmp.ge.f32.partialorder %v204, 0.0
    %vm249 = vcmp.ge.f32.partialorder %v208, 0.0
    %vm250 = vcmp.ge.f32.partialorder %v214, 0.0
    %vm251 = vcmp.ge.f32.partialorder %v218, 0.0
    %v252 = vmul.f32 %v144, 0.01
    %v253 = vmul.f32 %v148, 0.01
    %v254 = vmul.f32 %v154, 0.01
    %v255 = vmul.f32 %v158, 0.01
    %v256 = vmul.f32 %v164, 0.01
    %v257 = vmul.f32 %v168, 0.01
    %v258 = vmul.f32 %v174, 0.01
    %v259 = vmul.f32 %v178, 0.01
    %v260 = vmul.f32 %v184, 0.01
    %v261 = vmul.f32 %v188, 0.01
    %v262 = vmul.f32 %v194, 0.01
    %v263 = vmul.f32 %v198, 0.01
    %v264 = vmul.f32 %v204, 0.01
    %v265 = vmul.f32 %v208, 0.01
    %v266 = vmul.f32 %v214, 0.01
    %v267 = vmul.f32 %v218, 0.01
    %v268 = vsel %vm236, %v144, %v252
    %v269 = vsel %vm237, %v148, %v253
    %v270 = vsel %vm238, %v154, %v254
    %v271 = vsel %vm239, %v158, %v255
    %v272 = vsel %vm240, %v164, %v256
    %v273 = vsel %vm241, %v168, %v257
    %v274 = vsel %vm242, %v174, %v258
    %v275 = vsel %vm243, %v178, %v259
    %v276 = vsel %vm244, %v184, %v260
    %v277 = vsel %vm245, %v188, %v261
    %v278 = vsel %vm246, %v194, %v262
    %v279 = vsel %vm247, %v198, %v263
    %v280 = vsel %vm248, %v204, %v264
    %v281 = vsel %vm249, %v208, %v265
    %v282 = vsel %vm250, %v214, %v266
    %v283 = vsel %vm251, %v218, %v267
    %v284 = vmul.f32 %v220, %v268
    %v285 = vmul.f32 %v221, %v269
    %v286 = vmul.f32 %v222, %v270
    %v287 = vmul.f32 %v223, %v271
    %v288 = vmul.f32 %v224, %v272
    %v289 = vmul.f32 %v225, %v273
    %v290 = vmul.f32 %v226, %v274
    %v291 = vmul.f32 %v227, %v275
    %v292 = vmul.f32 %v228, %v276
    %v293 = vmul.f32 %v229, %v277
    %v294 = vmul.f32 %v230, %v278
    %v295 = vmul.f32 %v231, %v279
    %v296 = vmul.f32 %v232, %v280
    %v297 = vmul.f32 %v233, %v281
    %v298 = vmul.f32 %v234, %v282
    %v299 = vmul.f32 %v235, %v283
    %v300 = vld [vmem:[%s3] sm:$0x1]
    %v301 = vpack.c.bf16 %v285, %v284
    %v302 = vpack.c.bf16 %v287, %v286
    %v303 = vpack.c.bf16 %v289, %v288
    %v304 = vpack.c.bf16 %v291, %v290
    %v305 = vpack.c.bf16 %v293, %v292
    %v306 = vpack.c.bf16 %v295, %v294
    %v307 = vpack.c.bf16 %v297, %v296
    %v308 = vpack.c.bf16 %v299, %v298
    %309 = vmatprep.subr.bf16.mxu0 0
    %310 = vmatpush1.bf16.xpose.msra.mxu0 %v308
    %311 = vmatprep.subr.bf16.mxu0 0
    %312 = vmatpush1.bf16.xpose.msra.mxu0 %v307
    %313 = vmatprep.subr.bf16.mxu0 0
    %314 = vmatpush1.bf16.xpose.msra.mxu0 %v306
    %315 = vmatprep.subr.bf16.mxu0 0
    %316 = vmatpush1.bf16.xpose.msra.mxu0 %v305
    %317 = vmatprep.subr.bf16.mxu0 0
    %318 = vmatpush1.bf16.xpose.msra.mxu0 %v304
    %319 = vmatprep.subr.bf16.mxu0 0
    %320 = vmatpush1.bf16.xpose.msra.mxu0 %v303
    %321 = vmatprep.subr.bf16.mxu0 0
    %322 = vmatpush1.bf16.xpose.msra.mxu0 %v302
    %323 = vmatprep.subr.bf16.mxu0 0
    %324 = vmatpush1.bf16.xpose.msra.mxu0 %v301
    %325 = vmatprep.subr.bf16.mxu0 0
    %326 = vmatpush2.bf16.xpose.msra.mxu0 0
    %327 = vmatprep.subr.bf16.mxu0 0
    %328 = vmatpush2.bf16.xpose.msra.mxu0 0
    %329 = vmatprep.subr.bf16.mxu0 0
    %330 = vmatpush2.bf16.xpose.msra.mxu0 0
    %331 = vmatprep.subr.bf16.mxu0 0
    %332 = vmatpush2.bf16.xpose.msra.mxu0 0
    %333 = vmatprep.subr.bf16.mxu0 0
    %334 = vmatpush2.bf16.xpose.msra.mxu0 0
    %335 = vmatprep.subr.bf16.mxu0 0
    %336 = vmatpush2.bf16.xpose.msra.mxu0 0
    %337 = vmatprep.subr.bf16.mxu0 0
    %338 = vmatpush2.bf16.xpose.msra.mxu0 0
    %339 = vmatprep.subr.bf16.mxu0 0
    %340 = vmatpush2.bf16.xpose.msra.mxu0 0
    %341 = vmatprep.mubr.bf16.mxu0 0
    %342 = vmatmul.mubr.bf16.gmra.mxu0 %v300
    %v343 = vpop.f32.mrf.mxu0
    %v344 = vadd.f32 0.0, %v343
    %v345 = vpop.f32.mrf.mxu0
    %v346 = vpop.f32.mrf.mxu0
    %v347 = vpop.f32.mrf.mxu0
    %348 = vdwg.mxu0
    %v349 = vmul.f32 %v284, %v284
    %v350 = vmul.f32 %v285, %v285
    %v351 = vmul.f32 %v286, %v286
    %v352 = vmul.f32 %v287, %v287
    %v353 = vmul.f32 %v288, %v288
    %v354 = vmul.f32 %v289, %v289
    %v355 = vmul.f32 %v290, %v290
    %v356 = vmul.f32 %v291, %v291
    %v357 = vmul.f32 %v292, %v292
    %v358 = vmul.f32 %v293, %v293
    %v359 = vmul.f32 %v294, %v294
    %v360 = vmul.f32 %v295, %v295
    %v361 = vmul.f32 %v296, %v296
    %v362 = vmul.f32 %v297, %v297
    %v363 = vmul.f32 %v298, %v298
    %v364 = vmul.f32 %v299, %v299
    %365 = vmatprep.subr.mxu0 0.0
    %366 = vmatpush1.xpose.msra.mxu0 %v364
    %367 = vmatprep.subr.mxu0 0.0
    %368 = vmatpush1.xpose.msra.mxu0 %v363
    %369 = vmatprep.subr.mxu0 0.0
    %370 = vmatpush1.xpose.msra.mxu0 %v362
    %371 = vmatprep.subr.mxu0 0.0
    %372 = vmatpush1.xpose.msra.mxu0 %v361
    %373 = vmatprep.subr.mxu0 0.0
    %374 = vmatpush1.xpose.msra.mxu0 %v360
    %375 = vmatprep.subr.mxu0 0.0
    %376 = vmatpush1.xpose.msra.mxu0 %v359
    %377 = vmatprep.subr.mxu0 0.0
    %378 = vmatpush1.xpose.msra.mxu0 %v358
    %379 = vmatprep.subr.mxu0 0.0
    %380 = vmatpush1.xpose.msra.mxu0 %v357
    %381 = vmatprep.subr.mxu0 0.0
    %382 = vmatpush1.xpose.msra.mxu0 %v356
    %383 = vmatprep.subr.mxu0 0.0
    %384 = vmatpush1.xpose.msra.mxu0 %v355
    %385 = vmatprep.subr.mxu0 0.0
    %386 = vmatpush1.xpose.msra.mxu0 %v354
    %387 = vmatprep.subr.mxu0 0.0
    %388 = vmatpush1.xpose.msra.mxu0 %v353
    %389 = vmatprep.subr.mxu0 0.0
    %390 = vmatpush1.xpose.msra.mxu0 %v352
    %391 = vmatprep.subr.mxu0 0.0
    %392 = vmatpush1.xpose.msra.mxu0 %v351
    %393 = vmatprep.subr.mxu0 0.0
    %394 = vmatpush1.xpose.msra.mxu0 %v350
    %395 = vmatprep.subr.mxu0 0.0
    %396 = vmatpush1.xpose.msra.mxu0 %v349
    %397 = vmatprep.subr.mxu0 0.0
    %398 = vmatpush2.xpose.msra.mxu0 0.0
    %399 = vmatprep.subr.mxu0 0.0
    %400 = vmatpush2.xpose.msra.mxu0 0.0
    %401 = vmatprep.subr.mxu0 0.0
    %402 = vmatpush2.xpose.msra.mxu0 0.0
    %403 = vmatprep.subr.mxu0 0.0
    %404 = vmatpush2.xpose.msra.mxu0 0.0
    %405 = vmatprep.subr.mxu0 0.0
    %406 = vmatpush2.xpose.msra.mxu0 0.0
    %407 = vmatprep.subr.mxu0 0.0
    %408 = vmatpush2.xpose.msra.mxu0 0.0
    %409 = vmatprep.subr.mxu0 0.0
    %410 = vmatpush2.xpose.msra.mxu0 0.0
    %411 = vmatprep.subr.mxu0 0.0
    %412 = vmatpush2.xpose.msra.mxu0 0.0
    %413 = vmatprep.subr.mxu0 0.0
    %414 = vmatpush2.xpose.msra.mxu0 0.0
    %415 = vmatprep.subr.mxu0 0.0
    %416 = vmatpush2.xpose.msra.mxu0 0.0
    %417 = vmatprep.subr.mxu0 0.0
    %418 = vmatpush2.xpose.msra.mxu0 0.0
    %419 = vmatprep.subr.mxu0 0.0
    %420 = vmatpush2.xpose.msra.mxu0 0.0
    %421 = vmatprep.subr.mxu0 0.0
    %422 = vmatpush2.xpose.msra.mxu0 0.0
    %423 = vmatprep.subr.mxu0 0.0
    %424 = vmatpush2.xpose.msra.mxu0 0.0
    %425 = vmatprep.subr.mxu0 0.0
    %426 = vmatpush2.xpose.msra.mxu0 0.0
    %427 = vmatprep.subr.mxu0 0.0
    %428 = vmatpush2.xpose.msra.mxu0 0.0
    %429 = vmatprep.mubr.f32.mxu0 0.0
    %430 = vmatmul.mubr.f32.gmra.mxu0 1.0
    %v431 = vpop.f32.mrf.mxu0
    %v432 = vadd.f32 0.0, %v431
    %v433 = vpop.f32.mrf.mxu0
    %434 = vdwg.mxu0
    %v435 = vmax.f32 %v432, 1e-24
    %v436 = vrsqrt.pop %v435
    %v437 = vlaneseq
    %v438 = vshrl.u32 %v437, 7
    %v439 = vsub.s32 0, %v438
    %v440 = vrot.slane %v436, %v439
    %v441 = vmul.f32 %v344, %v440
    %v442 = vld [vmem:[%s4] sm:$0x3]
    %444 = vset.pattern.permute.xlu0 0
    %445 = vperm.xlu0 %444, %v442
    %v446 = vpop.permute.xlu0 %445
    %v448 = vadd.f32 %v441, %v446
    %v450 = vrot.slane %v448, 7
    %vm452 = vcmp.gt.f32.partialorder %v448, %v450
    %v453 = vsel %vm452, 0.0, 1.0
    %454 = vst [vmem:[#allocation2 - $0x1] sm:$0x2] %v453
    %v455 = vsel %vm452, 1.0, 0.0
    %456 = vst [vmem:[#allocation2] sm:$0x2] %v455
    %v457 = vrot.slane %v448, 1
    %v459 = vmax.f32 %v448, %v457
    %v460 = vsub.f32 %v448, %v459
    %v461 = vmul.f32 %v460, 1.442695
    %v462 = vpow.pop %v461
    %v464 = vrot.slane %v459, 7
    %v466 = vsub.f32 %v448, %v464
    %v467 = vmul.f32 %v466, 1.442695
    %v468 = vpow.pop %v467
    %v470 = vrot.slane %v468, 1
    %v472 = vadd.f32 %v462, %v470
    %v473 = vrcp.pop %v472
    %v474 = vmul.f32 %v462, %v473
    %475 = vst [vmem:[#allocation2 + $0x2] sm:$0x1] %v474
    %v477 = vrot.slane %v473, 7
    %v479 = vmul.f32 %v468, %v477
    %480 = vst [vmem:[#allocation2 + $0x2] sm:$0x2] %v479
    // Predicated region
    $region22: #{tpu_custom_call.1} parent=1 // pred_check
      _
    $region23: #{tpu_custom_call.1} parent=1 // pred_check_branch
      %482 = sbr.rel (0) target = $region25
    $region24: #{tpu_custom_call.1} parent=1 // pred_region
      %s484 = ssub.s32 64, 64
      %485 = vsyncadd [#allocation3], %s484
      %s487 = sshll.u32 [#allocation2], 4
      %s488 = int_to_ptr.vmem [resolvable:$true] %s487
      %490 = dma.vmem_to_hbm [thread:$0]  %s488, 64, %s5, [#allocation3]
    $region25: #{tpu_custom_call.1} parent=1 // pred_fallthru
      _
    // Predicated region
    $region26: #{tpu_custom_call.1} parent=1 // pred_check
      _
    $region27: #{tpu_custom_call.1} parent=1 // pred_check_branch
      %492 = sbr.rel (0) target = $region29
    $region28: #{tpu_custom_call.1} parent=1 // pred_region
      %493 = dma.done [#allocation3], 64
    $region29: #{tpu_custom_call.1} parent=1 // pred_fallthru
      _
    %494 = vsyncpa [#allocation3], 1

</llo_original>
